<compile_context>
chip_gen: v7x
topology: tpu7x:2x2x1
jax: 0.10.0
libtpu: 0.0.40
codegen_flags: <defaults>
</compile_context>

<pallas_src>
import jax
import jax.numpy as jnp
from jax.experimental import pallas as pl
from jax.experimental.pallas import tpu as pltpu


LANE = 128            # lane-dense padding target
DEFAULT_BATCH_TILE = 256


def _round_up(n, m):
    return ((n + m - 1) // m) * m


# --------------------------------------------------------------------------
# Host-side (one-time) folding of the linear prefix + lane padding.
# --------------------------------------------------------------------------
def _band_matrix(w, L_in, L_out, pad):
    """M[j, i] = w[j - i + pad]  so that (x @ M)[i] == conv1d(x, w, pad)[i]."""
    k = w.shape[-1]
    wv = w.reshape(k).astype(jnp.float32)
    j = jnp.arange(L_in)[:, None]
    i = jnp.arange(L_out)[None, :]
    t = j - i + pad
    valid = (t >= 0) & (t < k)
    return jnp.where(valid, wv[jnp.clip(t, 0, k - 1)], 0.0)


def _pad2(m, rows, cols):
    m = jnp.asarray(m, jnp.float32)
    return jnp.zeros((rows, cols), jnp.float32).at[:m.shape[0], :m.shape[1]].set(m)


def prepare_actor_params(params, input_dim, compute_dtype=jnp.bfloat16):
    """Fold conv1 -> conv2 -> even/odd pooling into E|O and lane-pad everything.

    Runs once at model-construction time (perf review item #1).
    """
    cw1, cb1, cw2, cb2, fw1, fb1, fw2, fb2, fw3, fb3 = params
    L = int(input_dim)
    assert L >= 8, "input_dim must be >= 8 for conv(k=7,p=1) + MaxPool1d(2,2)"
    L2 = L + 2 - 7 + 1                      # conv2: k=7, pad=1 (conv1 keeps length)
    P = (L2 - 2) // 2 + 1                   # MaxPool1d(2,2), floor mode
    assert P == L // 2 - 2, "pool length must match nn.Linear(input_dim//2 - 2, ...)"
    H = fw1.shape[0]
    OUT = fw3.shape[0]
    assert fw1.shape[1] == P, "fc1 in_features mismatch with folded prefix"

    P_pad = _round_up(P, LANE)
    H_pad = _round_up(H, LANE)
    OUT_SUB = _round_up(OUT, 8)             # sublane-padded transposed-output rows

    # conv1 / conv2 as band matrices, composed and split into even/odd columns.
    M1 = _band_matrix(cw1, L, L, 1)                       # (L, L)
    M2 = _band_matrix(cw2, L, L2, 1)                      # (L, L2)
    r = jnp.arange(L2)[:, None]
    c = jnp.arange(P)[None, :]
    even_sel = (r == 2 * c).astype(jnp.float32)           # (L2, P)
    odd_sel = (r == 2 * c + 1).astype(jnp.float32)
    M12 = M1 @ M2                                         # (L, L2)
    E = M12 @ even_sel                                    # (L, P)
    O = M12 @ odd_sel
    bias2 = cb1[0] * jnp.sum(M2, axis=0) + cb2[0]         # folded conv biases (L2,)
    be = bias2 @ even_sel                                 # (P,)
    bo = bias2 @ odd_sel

    # Concatenated E|O operand: one K=L, N=2*P_pad matmul, split at lane P_pad.
    EO = jnp.concatenate(
        [_pad2(E, L, P_pad), _pad2(O, L, P_pad)], axis=1).astype(compute_dtype)
    beo = jnp.concatenate(
        [_pad2(be[None, :], 1, P_pad), _pad2(bo[None, :], 1, P_pad)], axis=1)  # f32

    W1 = _pad2(fw1.T, P_pad, H_pad).astype(compute_dtype)
    b1 = _pad2(fb1[None, :], 1, H_pad)
    W2 = _pad2(fw2.T, H_pad, H_pad).astype(compute_dtype)
    b2 = _pad2(fb2[None, :], 1, H_pad)
    # Last fc is kept row-major (OUT_SUB, H_pad) so the kernel can emit logits^T
    # as a lane-dense (OUT_SUB, TB) block (small HBM writeback).
    W3T = _pad2(fw3, OUT_SUB, H_pad).astype(compute_dtype)
    b3T = _pad2(fb3[:, None], OUT_SUB, 1)

    weights = (EO, beo, W1, b1, W2, b2, W3T, b3T)
    dims = dict(L=L, P_pad=P_pad, H_pad=H_pad, OUT_SUB=OUT_SUB, out_dim=OUT)
    return weights, dims


# --------------------------------------------------------------------------
# Forward factory: folds once, returns a jitted (B, input_dim) -> (B, out) fn.
# --------------------------------------------------------------------------
def make_actor_forward(params, input_dim, *, compute_dtype=jnp.bfloat16,
                       batch_tile=DEFAULT_BATCH_TILE):
    weights, dims = prepare_actor_params(params, input_dim, compute_dtype)
    L, P_pad, H_pad = dims["L"], dims["P_pad"], dims["H_pad"]
    OUT_SUB, out_dim = dims["OUT_SUB"], dims["out_dim"]
    f32 = jnp.float32

    def actor_kernel(x_ref, eo_ref, beo_ref, w1_ref, b1_ref, w2_ref, b2_ref,
                     w3t_ref, b3t_ref, out_ref):
        cdt = w1_ref.dtype                  # MXU operand dtype (bf16 or f32)
        x = x_ref[...]                      # (TB, L), already in compute dtype

        # Folded conv1 -> conv2 -> even/odd selection in one matmul, then
        # MaxPool1d(2,2) as a tile-aligned lane split + maximum.
        pre = jnp.dot(x, eo_ref[...], preferred_element_type=f32) + beo_ref[...]
        p = jnp.maximum(pre[:, :P_pad], pre[:, P_pad:])           # (TB, P_pad)

        # fc1 -> relu -> fc2 -> relu  (f32 accumulation, f32 biases)
        h = jnp.dot(p.astype(cdt), w1_ref[...], preferred_element_type=f32) + b1_ref[...]
        h = jnp.maximum(h, 0.0)
        h = jnp.dot(h.astype(cdt), w2_ref[...], preferred_element_type=f32) + b2_ref[...]
        h = jnp.maximum(h, 0.0)

        # fc3 computed transposed: logits^T = W3 @ h^T -> (OUT_SUB, TB).
        # Output block is lane-dense over batch -> tiny, unmasked HBM writeback.
        out_t = jax.lax.dot_general(
            w3t_ref[...], h.astype(cdt),
            dimension_numbers=(((1,), (1,)), ((), ())),
            preferred_element_type=f32)
        out_ref[...] = (out_t + b3t_ref[...]).astype(out_ref.dtype)

    @jax.jit
    def forward(x):
        if x.ndim == 1:                     # module's unsqueeze(0) contract
            x = x[None, :]
        B = x.shape[0]
        assert x.shape[1] == L

        # Batch-tile selection: big tile to amortize per-step overhead, but keep
        # >= 2 grid steps whenever possible so v7x's two TensorCores both work.
        B_pad = _round_up(B, LANE)
        tile = min(batch_tile, B_pad)
        if B_pad // tile < 2 and B_pad >= 2 * LANE:
            tile = B_pad // 2
        tile = max(LANE, (tile // LANE) * LANE)
        B_pad = _round_up(B_pad, tile)

        # Pad x directly in the compute dtype (no intermediate f32 copy).
        xb = jnp.zeros((B_pad, L), compute_dtype).at[:B, :].set(
            x.astype(compute_dtype))

        def full(shape):
            return pl.BlockSpec(shape, lambda i: (0, 0))

        out_t = pl.pallas_call(
            actor_kernel,
            out_shape=jax.ShapeDtypeStruct((OUT_SUB, B_pad), jnp.float32),
            grid_spec=pltpu.PrefetchScalarGridSpec(
                num_scalar_prefetch=0,
                grid=(B_pad // tile,),
                in_specs=[
                    pl.BlockSpec((tile, L), lambda i: (i, 0)),     # x tile
                    full((L, 2 * P_pad)), full((1, 2 * P_pad)),    # E|O, biases
                    full((P_pad, H_pad)), full((1, H_pad)),        # fc1
                    full((H_pad, H_pad)), full((1, H_pad)),        # fc2
                    full((OUT_SUB, H_pad)), full((OUT_SUB, 1)),    # fc3 (transposed)
                ],
                out_specs=pl.BlockSpec((OUT_SUB, tile), lambda i: (0, i)),
            ),
            compiler_params=pltpu.CompilerParams(
                dimension_semantics=("parallel",)),
        )(xb, *weights)

        return out_t[:out_dim, :B].T        # (B, output_dim) logits

    return forward


# --------------------------------------------------------------------------
# Synthetic init (PyTorch parameter shapes) + pure-JAX reference
# --------------------------------------------------------------------------
def init_params(key, input_dim, output_dim, hidden_dim=32, kernel_size=2, stride=2):
    ks = jax.random.split(key, 10)

    def u(k, shape, fan_in):
        bound = 1.0 / jnp.sqrt(jnp.float32(fan_in))
        return jax.random.uniform(k, shape, jnp.float32, -bound, bound)

    fc1_in = input_dim // stride - kernel_size
    cw1 = u(ks[0], (1, 1, 3), 3);            cb1 = u(ks[1], (1,), 3)
    cw2 = u(ks[2], (1, 1, 7), 7);            cb2 = u(ks[3], (1,), 7)
    fw1 = u(ks[4], (hidden_dim, fc1_in), fc1_in); fb1 = u(ks[5], (hidden_dim,), fc1_in)
    fw2 = u(ks[6], (hidden_dim, hidden_dim), hidden_dim); fb2 = u(ks[7], (hidden_dim,), hidden_dim)
    fw3 = u(ks[8], (output_dim, hidden_dim), hidden_dim); fb3 = u(ks[9], (output_dim,), hidden_dim)
    return (cw1, cb1, cw2, cb2, fw1, fb1, fw2, fb2, fw3, fb3)


def reference_forward(x, params):
    """Pure-JAX reference mirroring the PyTorch forward, batched over rows."""
    cw1, cb1, cw2, cb2, fw1, fb1, fw2, fb2, fw3, fb3 = params
    hi = jax.lax.Precision.HIGHEST

    def conv1d(v, w, b, pad):
        k = w.shape[-1]
        vp = jnp.pad(v, (pad, pad))
        L_out = v.shape[0] + 2 * pad - k + 1
        rows = jnp.stack([jnp.sum(vp[i:i + k] * w.reshape(-1)) for i in range(L_out)])
        return rows + b[0]

    def prefix(v):
        v = conv1d(v, cw1, cb1, 1)
        v = conv1d(v, cw2, cb2, 1)
        P = (v.shape[0] - 2) // 2 + 1
        return jnp.max(v[:2 * P].reshape(P, 2), axis=1)

    p = jax.vmap(prefix)(x.astype(jnp.float32))
    h = jax.nn.relu(jnp.dot(p, fw1.T, precision=hi) + fb1)
    h = jax.nn.relu(jnp.dot(h, fw2.T, precision=hi) + fb2)
    return jnp.dot(h, fw3.T, precision=hi) + fb3


if __name__ == "__main__":
    input_dim, output_dim, hidden_dim = 16, 4, 32
    batch = 256

    key = jax.random.PRNGKey(0)
    kx, kp = jax.random.split(key)
    x = jax.random.normal(kx, (batch, input_dim), jnp.float32)
    params = init_params(kp, input_dim, output_dim, hidden_dim)

    ref = jax.block_until_ready(reference_forward(x, params))

    # Default path: bf16 MXU operands + f32 accumulation (v6e/v7x fast path).
    # batch=256 -> tile capped to 128 so the grid keeps 2 steps (v7x megacore).
    fwd_bf16 = make_actor_forward(params, input_dim)
    out_bf16 = jax.block_until_ready(fwd_bf16(x))
    assert out_bf16.shape == (batch, output_dim)
    assert float(jnp.max(jnp.abs(out_bf16 - ref))) < 0.1

    # f32 operand path (recommended default on v5e).
    fwd_f32 = make_actor_forward(params, input_dim, compute_dtype=jnp.float32)
    out_f32 = jax.block_until_ready(fwd_f32(x))
    assert out_f32.shape == (batch, output_dim)
    assert jnp.allclose(out_f32, ref, atol=1e-3, rtol=1e-3), \
        float(jnp.max(jnp.abs(out_f32 - ref)))

    # Larger batch exercises the batch_tile=256 path with >= 2 grid steps.
    x2 = jax.random.normal(jax.random.PRNGKey(1), (512, input_dim), jnp.float32)
    ref2 = reference_forward(x2, params)
    out2 = jax.block_until_ready(fwd_f32(x2))
    assert jnp.allclose(out2, ref2, atol=1e-3, rtol=1e-3)

    # Unbatched call keeps the module's (input_dim,) -> (1, output_dim) contract.
    out1 = jax.block_until_ready(fwd_f32(x[0]))
    assert out1.shape == (1, output_dim)
    assert jnp.allclose(out1, ref[:1], atol=1e-3, rtol=1e-3)

    print("KERNEL_OK")
</pallas_src>

<mosaic_0001>
module attributes {stable_mosaic.version = 11 : i64} {
  func.func @actor_kernel(%arg0: i32, %arg1: memref<128x16xbf16, #tpu.memory_space<vmem>>, %arg2: memref<16x256xbf16, #tpu.memory_space<vmem>>, %arg3: memref<1x256xf32, #tpu.memory_space<vmem>>, %arg4: memref<128x128xbf16, #tpu.memory_space<vmem>>, %arg5: memref<1x128xf32, #tpu.memory_space<vmem>>, %arg6: memref<128x128xbf16, #tpu.memory_space<vmem>>, %arg7: memref<1x128xf32, #tpu.memory_space<vmem>>, %arg8: memref<8x128xbf16, #tpu.memory_space<vmem>>, %arg9: memref<8x1xf32, #tpu.memory_space<vmem>>, %arg10: memref<8x128xf32, #tpu.memory_space<vmem>>) attributes {dimension_semantics = [#tpu.dimension_semantics<parallel>], iteration_bounds = array<i64: 2>, scalar_prefetch = 0 : i64, scratch_operands = 0 : i64, tpu.core_type = #tpu.core_type<tc>, window_params = [{transform_indices = @transform_0, window_bounds = array<i64: 128, 16>}, {pipeline_mode = #tpu.pipeline_mode<synchronous>, transform_indices = @transform_1, window_bounds = array<i64: 16, 256>}, {pipeline_mode = #tpu.pipeline_mode<synchronous>, transform_indices = @transform_2, window_bounds = array<i64: 1, 256>}, {pipeline_mode = #tpu.pipeline_mode<synchronous>, transform_indices = @transform_3, window_bounds = array<i64: 128, 128>}, {pipeline_mode = #tpu.pipeline_mode<synchronous>, transform_indices = @transform_4, window_bounds = array<i64: 1, 128>}, {pipeline_mode = #tpu.pipeline_mode<synchronous>, transform_indices = @transform_5, window_bounds = array<i64: 128, 128>}, {pipeline_mode = #tpu.pipeline_mode<synchronous>, transform_indices = @transform_6, window_bounds = array<i64: 1, 128>}, {pipeline_mode = #tpu.pipeline_mode<synchronous>, transform_indices = @transform_7, window_bounds = array<i64: 8, 128>}, {pipeline_mode = #tpu.pipeline_mode<synchronous>, transform_indices = @transform_8, window_bounds = array<i64: 8, 1>}, {transform_indices = @transform_9, window_bounds = array<i64: 8, 128>}]} {
    %c0 = arith.constant 0 : index
    %c0_0 = arith.constant 0 : index
    %0 = vector.load %arg1[%c0, %c0_0] : memref<128x16xbf16, #tpu.memory_space<vmem>>, vector<128x16xbf16>
    %c0_1 = arith.constant 0 : index
    %c0_2 = arith.constant 0 : index
    %1 = vector.load %arg2[%c0_1, %c0_2] : memref<16x256xbf16, #tpu.memory_space<vmem>>, vector<16x256xbf16>
    %cst = arith.constant dense<0.000000e+00> : vector<128x256xf32>
    %2 = tpu.matmul %0, %1, %cst {dimension_numbers = #tpu.dot_dimension_numbers<[1], [0], [0], [1], [0, 0, 1, 1], [], []>} : vector<128x16xbf16>, vector<16x256xbf16>, vector<128x256xf32> -> vector<128x256xf32>
    %c0_3 = arith.constant 0 : index
    %c0_4 = arith.constant 0 : index
    %3 = vector.load %arg3[%c0_3, %c0_4] : memref<1x256xf32, #tpu.memory_space<vmem>>, vector<1x256xf32>
    %4 = vector.broadcast %3 : vector<1x256xf32> to vector<128x256xf32>
    %5 = arith.addf %2, %4 : vector<128x256xf32>
    %6 = vector.extract_strided_slice %5 {offsets = [0, 0], sizes = [128, 128], strides = [1, 1]} : vector<128x256xf32> to vector<128x128xf32>
    %7 = vector.extract_strided_slice %5 {offsets = [0, 128], sizes = [128, 128], strides = [1, 1]} : vector<128x256xf32> to vector<128x128xf32>
    %8 = arith.maximumf %6, %7 : vector<128x128xf32>
    %9 = arith.truncf %8 : vector<128x128xf32> to vector<128x128xbf16>
    %c0_5 = arith.constant 0 : index
    %c0_6 = arith.constant 0 : index
    %10 = vector.load %arg4[%c0_5, %c0_6] : memref<128x128xbf16, #tpu.memory_space<vmem>>, vector<128x128xbf16>
    %cst_7 = arith.constant dense<0.000000e+00> : vector<128x128xf32>
    %11 = tpu.matmul %9, %10, %cst_7 {dimension_numbers = #tpu.dot_dimension_numbers<[1], [0], [0], [1], [0, 0, 1, 1], [], []>} : vector<128x128xbf16>, vector<128x128xbf16>, vector<128x128xf32> -> vector<128x128xf32>
    %c0_8 = arith.constant 0 : index
    %c0_9 = arith.constant 0 : index
    %12 = vector.load %arg5[%c0_8, %c0_9] : memref<1x128xf32, #tpu.memory_space<vmem>>, vector<1x128xf32>
    %13 = vector.broadcast %12 : vector<1x128xf32> to vector<128x128xf32>
    %14 = arith.addf %11, %13 : vector<128x128xf32>
    %cst_10 = arith.constant 0.000000e+00 : f32
    %15 = vector.broadcast %cst_10 : f32 to vector<128x128xf32>
    %16 = arith.maximumf %14, %15 : vector<128x128xf32>
    %17 = arith.truncf %16 : vector<128x128xf32> to vector<128x128xbf16>
    %c0_11 = arith.constant 0 : index
    %c0_12 = arith.constant 0 : index
    %18 = vector.load %arg6[%c0_11, %c0_12] : memref<128x128xbf16, #tpu.memory_space<vmem>>, vector<128x128xbf16>
    %cst_13 = arith.constant dense<0.000000e+00> : vector<128x128xf32>
    %19 = tpu.matmul %17, %18, %cst_13 {dimension_numbers = #tpu.dot_dimension_numbers<[1], [0], [0], [1], [0, 0, 1, 1], [], []>} : vector<128x128xbf16>, vector<128x128xbf16>, vector<128x128xf32> -> vector<128x128xf32>
    %c0_14 = arith.constant 0 : index
    %c0_15 = arith.constant 0 : index
    %20 = vector.load %arg7[%c0_14, %c0_15] : memref<1x128xf32, #tpu.memory_space<vmem>>, vector<1x128xf32>
    %21 = vector.broadcast %20 : vector<1x128xf32> to vector<128x128xf32>
    %22 = arith.addf %19, %21 : vector<128x128xf32>
    %cst_16 = arith.constant 0.000000e+00 : f32
    %23 = vector.broadcast %cst_16 : f32 to vector<128x128xf32>
    %24 = arith.maximumf %22, %23 : vector<128x128xf32>
    %c0_17 = arith.constant 0 : index
    %c0_18 = arith.constant 0 : index
    %25 = vector.load %arg8[%c0_17, %c0_18] : memref<8x128xbf16, #tpu.memory_space<vmem>>, vector<8x128xbf16>
    %26 = arith.truncf %24 : vector<128x128xf32> to vector<128x128xbf16>
    %cst_19 = arith.constant dense<0.000000e+00> : vector<8x128xf32>
    %27 = tpu.matmul %25, %26, %cst_19 {dimension_numbers = #tpu.dot_dimension_numbers<[1], [1], [0], [0], [0, 0, 1, 0], [], []>} : vector<8x128xbf16>, vector<128x128xbf16>, vector<8x128xf32> -> vector<8x128xf32>
    %c0_20 = arith.constant 0 : index
    %c0_21 = arith.constant 0 : index
    %28 = vector.load %arg9[%c0_20, %c0_21] : memref<8x1xf32, #tpu.memory_space<vmem>>, vector<8x1xf32>
    %29 = vector.broadcast %28 : vector<8x1xf32> to vector<8x128xf32>
    %30 = arith.addf %27, %29 : vector<8x128xf32>
    %c0_22 = arith.constant 0 : index
    %c0_23 = arith.constant 0 : index
    %31 = vector.load %arg10[%c0_22, %c0_23] : memref<8x128xf32, #tpu.memory_space<vmem>>, vector<8x128xf32>
    tpu.vector_store %arg10[%c0_22, %c0_23], %30 {strides = array<i32>} : memref<8x128xf32, #tpu.memory_space<vmem>>, vector<8x128xf32>,
    return
  }
  func.func @transform_0(%arg0: i32) -> (i32, i32) {
    %c0_i32 = arith.constant 0 : i32
    %c0_i32_0 = arith.constant 0 : i32
    return %arg0, %c0_i32 : i32, i32
  }
  func.func @transform_1(%arg0: i32) -> (i32, i32) {
    %c0_i32 = arith.constant 0 : i32
    %c0_i32_0 = arith.constant 0 : i32
    %c0_i32_1 = arith.constant 0 : i32
    return %c0_i32, %c0_i32_0 : i32, i32
  }
  func.func @transform_2(%arg0: i32) -> (i32, i32) {
    %c0_i32 = arith.constant 0 : i32
    %c0_i32_0 = arith.constant 0 : i32
    %c0_i32_1 = arith.constant 0 : i32
    return %c0_i32, %c0_i32_0 : i32, i32
  }
  func.func @transform_3(%arg0: i32) -> (i32, i32) {
    %c0_i32 = arith.constant 0 : i32
    %c0_i32_0 = arith.constant 0 : i32
    %c0_i32_1 = arith.constant 0 : i32
    return %c0_i32, %c0_i32_0 : i32, i32
  }
  func.func @transform_4(%arg0: i32) -> (i32, i32) {
    %c0_i32 = arith.constant 0 : i32
    %c0_i32_0 = arith.constant 0 : i32
    %c0_i32_1 = arith.constant 0 : i32
    return %c0_i32, %c0_i32_0 : i32, i32
  }
  func.func @transform_5(%arg0: i32) -> (i32, i32) {
    %c0_i32 = arith.constant 0 : i32
    %c0_i32_0 = arith.constant 0 : i32
    %c0_i32_1 = arith.constant 0 : i32
    return %c0_i32, %c0_i32_0 : i32, i32
  }
  func.func @transform_6(%arg0: i32) -> (i32, i32) {
    %c0_i32 = arith.constant 0 : i32
    %c0_i32_0 = arith.constant 0 : i32
    %c0_i32_1 = arith.constant 0 : i32
    return %c0_i32, %c0_i32_0 : i32, i32
  }
  func.func @transform_7(%arg0: i32) -> (i32, i32) {
    %c0_i32 = arith.constant 0 : i32
    %c0_i32_0 = arith.constant 0 : i32
    %c0_i32_1 = arith.constant 0 : i32
    return %c0_i32, %c0_i32_0 : i32, i32
  }
  func.func @transform_8(%arg0: i32) -> (i32, i32) {
    %c0_i32 = arith.constant 0 : i32
    %c0_i32_0 = arith.constant 0 : i32
    %c0_i32_1 = arith.constant 0 : i32
    return %c0_i32, %c0_i32_0 : i32, i32
  }
  func.func @transform_9(%arg0: i32) -> (i32, i32) {
    %c0_i32 = arith.constant 0 : i32
    %c0_i32_0 = arith.constant 0 : i32
    return %c0_i32, %arg0 : i32, i32
  }
}

</mosaic_0001>

<llo_original>
// kernel: forward.1
$region0: #{forward.1}
  #allocation0 [shape = 'u32[]', space=smem, size = 0x4, offset = 0x4, fixed_abs, tag = 'smem constant byte address 0x4 - core index']
  #allocation1 [shape = 'u32[144,128]{1,0:T(1,128)}', space=vmem, size = 0x12000, scoped, tag = 'internal scratch']
  %s0 = inlined_call_operand.vmem [shape: bf16[256,16], index: 0, kind: input, shape index: {}]
  %s1 = inlined_call_operand.vmem [shape: bf16[16,256], index: 1, kind: input, shape index: {}]
  %s2 = inlined_call_operand.vmem [shape: f32[1,256], index: 2, kind: input, shape index: {}]
  %s3 = inlined_call_operand.vmem [shape: bf16[128,128], index: 3, kind: input, shape index: {}]
  %s4 = inlined_call_operand.vmem [shape: f32[1,128], index: 4, kind: input, shape index: {}]
  %s5 = inlined_call_operand.vmem [shape: bf16[128,128], index: 5, kind: input, shape index: {}]
  %s6 = inlined_call_operand.vmem [shape: f32[1,128], index: 6, kind: input, shape index: {}]
  %s7 = inlined_call_operand.vmem [shape: bf16[8,128], index: 7, kind: input, shape index: {}]
  %s8 = inlined_call_operand.vmem [shape: f32[8,1], index: 8, kind: input, shape index: {}]
  %s9 = inlined_call_operand.vmem [shape: f32[8,256], index: 9, kind: output, shape index: {}]
  %s10 = sld [smem:[#allocation0]]
  $region69: #{forward.1} parent=0
    _
  %s12 = ssub.s32 1, %s10
  %s13 = scalar_select 0, %s12, %s10
  loop: start=0, step=1, limit=4
  $region2: #{forward.1} parent=0 // loop_pre_header
    _
  $region3: #{forward.1} parent=0 // loop_header
    %s15 = sphi 0, %s19
    %p16 = scmp.ge.s32.totalorder %s15, 4
    %s25 = sphi 0, %s27
    %s28 = sphi 0, %s25
    %s29 = sphi 0, %s28
    %s45 = sphi 0, %s29
    %s49 = sphi 0, %s49
    %s51 = sphi 0, %s49
    %s52 = sphi 0, %s51
    %s66 = sphi 0, %s52
    %s70 = sphi 0, %s70
    %s72 = sphi 0, %s70
    %s73 = sphi 0, %s72
    %s87 = sphi 0, %s73
    %s91 = sphi 0, %s91
    %s93 = sphi 0, %s91
    %s94 = sphi 0, %s93
    %s108 = sphi 0, %s94
    %s112 = sphi 0, %s112
    %s114 = sphi 0, %s112
    %s115 = sphi 0, %s114
    %s129 = sphi 0, %s115
    %s133 = sphi 0, %s133
    %s135 = sphi 0, %s133
    %s136 = sphi 0, %s135
    %s150 = sphi 0, %s136
    %s154 = sphi 0, %s154
    %s156 = sphi 0, %s154
    %s157 = sphi 0, %s156
    %s171 = sphi 0, %s157
    %s175 = sphi 0, %s175
    %s177 = sphi 0, %s175
    %s178 = sphi 0, %s177
    %s192 = sphi 0, %s178
    %s196 = sphi 0, %s196
    %s198 = sphi 0, %s196
    %s199 = sphi 0, %s198
    %s213 = sphi 0, %s199
    %s219 = sphi 0, %s221
    %s222 = sphi 0, %s219
    %s223 = sphi 0, %s222
    %s239 = sphi 0, %s223
  $region4: #{forward.1} parent=0 // loop_header_branch
    %18 = sbr.rel (%p16) target = $region8
  $region5: #{forward.1} parent=0 // loop_body
    %s20 = ssub.s32 %s15, 1
    %s21 = ssub.s32 %s15, 2
    %s22 = sadd.s32 %s15, 1
    %s23 = ssub.s32 %s15, %s22
    %p24 = scmp.eq.s32.totalorder %s23, 0
    %s26 = sadd.s32 %s25, 1
    %s27 = scalar_select %p24, %s25, %s26
    %p30 = pneg %p24
    %p31 = scmp.eq.s32.totalorder %s15, 1
    %p32 = por %p30, %p31
    %p33 = scmp.ne.s32.totalorder %s25, %s28
    %p34 = scmp.eq.s32.totalorder %s15, 0
    %p35 = por %p33, %p34
    %p36 = scmp.ne.s32.totalorder %s25, %s28
    %p37 = scmp.eq.s32.totalorder %s20, 1
    %p38 = por %p36, %p37
    %p39 = scmp.ne.s32.totalorder %s28, %s29
    %p40 = scmp.eq.s32.totalorder %s20, 0
    %p41 = por %p39, %p40
    %p42 = scmp.ne.s32.totalorder %s28, %s29
    %p43 = scmp.eq.s32.totalorder %s21, 1
    %p44 = por %p42, %p43
    %p46 = scmp.ne.s32.totalorder %s29, %s45
    %p47 = scmp.eq.s32.totalorder %s21, 0
    %p48 = por %p46, %p47
    %s50 = sadd.s32 %s49, 1
    %p53 = scmp.eq.s32.totalorder %s15, 1
    %p54 = scmp.ne.s32.totalorder %s49, %s51
    %p55 = scmp.eq.s32.totalorder %s15, 0
    %p56 = por %p54, %p55
    %p57 = scmp.ne.s32.totalorder %s49, %s51
    %p58 = scmp.eq.s32.totalorder %s20, 1
    %p59 = por %p57, %p58
    %p60 = scmp.ne.s32.totalorder %s51, %s52
    %p61 = scmp.eq.s32.totalorder %s20, 0
    %p62 = por %p60, %p61
    %p63 = scmp.ne.s32.totalorder %s51, %s52
    %p64 = scmp.eq.s32.totalorder %s21, 1
    %p65 = por %p63, %p64
    %p67 = scmp.ne.s32.totalorder %s52, %s66
    %p68 = scmp.eq.s32.totalorder %s21, 0
    %p69 = por %p67, %p68
    %s71 = sadd.s32 %s70, 1
    %p74 = scmp.eq.s32.totalorder %s15, 1
    %p75 = scmp.ne.s32.totalorder %s70, %s72
    %p76 = scmp.eq.s32.totalorder %s15, 0
    %p77 = por %p75, %p76
    %p78 = scmp.ne.s32.totalorder %s70, %s72
    %p79 = scmp.eq.s32.totalorder %s20, 1
    %p80 = por %p78, %p79
    %p81 = scmp.ne.s32.totalorder %s72, %s73
    %p82 = scmp.eq.s32.totalorder %s20, 0
    %p83 = por %p81, %p82
    %p84 = scmp.ne.s32.totalorder %s72, %s73
    %p85 = scmp.eq.s32.totalorder %s21, 1
    %p86 = por %p84, %p85
    %p88 = scmp.ne.s32.totalorder %s73, %s87
    %p89 = scmp.eq.s32.totalorder %s21, 0
    %p90 = por %p88, %p89
    %s92 = sadd.s32 %s91, 1
    %p95 = scmp.eq.s32.totalorder %s15, 1
    %p96 = scmp.ne.s32.totalorder %s91, %s93
    %p97 = scmp.eq.s32.totalorder %s15, 0
    %p98 = por %p96, %p97
    %p99 = scmp.ne.s32.totalorder %s91, %s93
    %p100 = scmp.eq.s32.totalorder %s20, 1
    %p101 = por %p99, %p100
    %p102 = scmp.ne.s32.totalorder %s93, %s94
    %p103 = scmp.eq.s32.totalorder %s20, 0
    %p104 = por %p102, %p103
    %p105 = scmp.ne.s32.totalorder %s93, %s94
    %p106 = scmp.eq.s32.totalorder %s21, 1
    %p107 = por %p105, %p106
    %p109 = scmp.ne.s32.totalorder %s94, %s108
    %p110 = scmp.eq.s32.totalorder %s21, 0
    %p111 = por %p109, %p110
    %s113 = sadd.s32 %s112, 1
    %p116 = scmp.eq.s32.totalorder %s15, 1
    %p117 = scmp.ne.s32.totalorder %s112, %s114
    %p118 = scmp.eq.s32.totalorder %s15, 0
    %p119 = por %p117, %p118
    %p120 = scmp.ne.s32.totalorder %s112, %s114
    %p121 = scmp.eq.s32.totalorder %s20, 1
    %p122 = por %p120, %p121
    %p123 = scmp.ne.s32.totalorder %s114, %s115
    %p124 = scmp.eq.s32.totalorder %s20, 0
    %p125 = por %p123, %p124
    %p126 = scmp.ne.s32.totalorder %s114, %s115
    %p127 = scmp.eq.s32.totalorder %s21, 1
    %p128 = por %p126, %p127
    %p130 = scmp.ne.s32.totalorder %s115, %s129
    %p131 = scmp.eq.s32.totalorder %s21, 0
    %p132 = por %p130, %p131
    %s134 = sadd.s32 %s133, 1
    %p137 = scmp.eq.s32.totalorder %s15, 1
    %p138 = scmp.ne.s32.totalorder %s133, %s135
    %p139 = scmp.eq.s32.totalorder %s15, 0
    %p140 = por %p138, %p139
    %p141 = scmp.ne.s32.totalorder %s133, %s135
    %p142 = scmp.eq.s32.totalorder %s20, 1
    %p143 = por %p141, %p142
    %p144 = scmp.ne.s32.totalorder %s135, %s136
    %p145 = scmp.eq.s32.totalorder %s20, 0
    %p146 = por %p144, %p145
    %p147 = scmp.ne.s32.totalorder %s135, %s136
    %p148 = scmp.eq.s32.totalorder %s21, 1
    %p149 = por %p147, %p148
    %p151 = scmp.ne.s32.totalorder %s136, %s150
    %p152 = scmp.eq.s32.totalorder %s21, 0
    %p153 = por %p151, %p152
    %s155 = sadd.s32 %s154, 1
    %p158 = scmp.eq.s32.totalorder %s15, 1
    %p159 = scmp.ne.s32.totalorder %s154, %s156
    %p160 = scmp.eq.s32.totalorder %s15, 0
    %p161 = por %p159, %p160
    %p162 = scmp.ne.s32.totalorder %s154, %s156
    %p163 = scmp.eq.s32.totalorder %s20, 1
    %p164 = por %p162, %p163
    %p165 = scmp.ne.s32.totalorder %s156, %s157
    %p166 = scmp.eq.s32.totalorder %s20, 0
    %p167 = por %p165, %p166
    %p168 = scmp.ne.s32.totalorder %s156, %s157
    %p169 = scmp.eq.s32.totalorder %s21, 1
    %p170 = por %p168, %p169
    %p172 = scmp.ne.s32.totalorder %s157, %s171
    %p173 = scmp.eq.s32.totalorder %s21, 0
    %p174 = por %p172, %p173
    %s176 = sadd.s32 %s175, 1
    %p179 = scmp.eq.s32.totalorder %s15, 1
    %p180 = scmp.ne.s32.totalorder %s175, %s177
    %p181 = scmp.eq.s32.totalorder %s15, 0
    %p182 = por %p180, %p181
    %p183 = scmp.ne.s32.totalorder %s175, %s177
    %p184 = scmp.eq.s32.totalorder %s20, 1
    %p185 = por %p183, %p184
    %p186 = scmp.ne.s32.totalorder %s177, %s178
    %p187 = scmp.eq.s32.totalorder %s20, 0
    %p188 = por %p186, %p187
    %p189 = scmp.ne.s32.totalorder %s177, %s178
    %p190 = scmp.eq.s32.totalorder %s21, 1
    %p191 = por %p189, %p190
    %p193 = scmp.ne.s32.totalorder %s178, %s192
    %p194 = scmp.eq.s32.totalorder %s21, 0
    %p195 = por %p193, %p194
    %s197 = sadd.s32 %s196, 1
    %p200 = scmp.eq.s32.totalorder %s15, 1
    %p201 = scmp.ne.s32.totalorder %s196, %s198
    %p202 = scmp.eq.s32.totalorder %s15, 0
    %p203 = por %p201, %p202
    %p204 = scmp.ne.s32.totalorder %s196, %s198
    %p205 = scmp.eq.s32.totalorder %s20, 1
    %p206 = por %p204, %p205
    %p207 = scmp.ne.s32.totalorder %s198, %s199
    %p208 = scmp.eq.s32.totalorder %s20, 0
    %p209 = por %p207, %p208
    %p210 = scmp.ne.s32.totalorder %s198, %s199
    %p211 = scmp.eq.s32.totalorder %s21, 1
    %p212 = por %p210, %p211
    %p214 = scmp.ne.s32.totalorder %s199, %s213
    %p215 = scmp.eq.s32.totalorder %s21, 0
    %p216 = por %p214, %p215
    %s217 = ssub.s32 %s15, %s22
    %p218 = scmp.eq.s32.totalorder %s217, 0
    %s220 = sadd.s32 %s219, 1
    %s221 = scalar_select %p218, %s219, %s220
    %p224 = pneg %p218
    %p225 = scmp.eq.s32.totalorder %s15, 1
    %p226 = por %p224, %p225
    %p227 = scmp.ne.s32.totalorder %s219, %s222
    %p228 = scmp.eq.s32.totalorder %s15, 0
    %p229 = por %p227, %p228
    %p230 = scmp.ne.s32.totalorder %s219, %s222
    %p231 = scmp.eq.s32.totalorder %s20, 1
    %p232 = por %p230, %p231
    %p233 = scmp.ne.s32.totalorder %s222, %s223
    %p234 = scmp.eq.s32.totalorder %s20, 0
    %p235 = por %p233, %p234
    %p236 = scmp.ne.s32.totalorder %s222, %s223
    %p237 = scmp.eq.s32.totalorder %s21, 1
    %p238 = por %p236, %p237
    %p240 = scmp.ne.s32.totalorder %s223, %s239
    %p241 = scmp.eq.s32.totalorder %s21, 0
    %p242 = por %p240, %p241
    %p243 = scmp.le.s32.totalorder 1, %s15
    %p244 = scmp.lt.s32.totalorder %s15, 3
    %p245 = pnand %p243, %p244
    %p246 = pneg %p245
    // Predicated region
    $region9: #{forward.1} parent=5 // pred_check
      _
    $region10: #{forward.1} parent=5 // pred_check_branch
      %248 = sbr.rel (%p245) target = $region12
    $region11: #{forward.1} parent=5 // pred_region
      %s249 = ssub.s32 %s15, 1
      // Predicated region
      $region13: #{forward.1} parent=11 // pred_check
        %p250 = pneg %p62
      $region14: #{forward.1} parent=11 // pred_check_branch
        %252 = sbr.rel (%p250) target = $region16
      $region15: #{forward.1} parent=11 // pred_region
        _
      $region16: #{forward.1} parent=11 // pred_fallthru
        _
      // Predicated region
      $region17: #{forward.1} parent=11 // pred_check
        %p253 = pneg %p83
      $region18: #{forward.1} parent=11 // pred_check_branch
        %255 = sbr.rel (%p253) target = $region20
      $region19: #{forward.1} parent=11 // pred_region
        _
      $region20: #{forward.1} parent=11 // pred_fallthru
        _
      // Predicated region
      $region21: #{forward.1} parent=11 // pred_check
        %p256 = pneg %p104
      $region22: #{forward.1} parent=11 // pred_check_branch
        %258 = sbr.rel (%p256) target = $region24
      $region23: #{forward.1} parent=11 // pred_region
        _
      $region24: #{forward.1} parent=11 // pred_fallthru
        _
      // Predicated region
      $region25: #{forward.1} parent=11 // pred_check
        %p259 = pneg %p125
      $region26: #{forward.1} parent=11 // pred_check_branch
        %261 = sbr.rel (%p259) target = $region28
      $region27: #{forward.1} parent=11 // pred_region
        _
      $region28: #{forward.1} parent=11 // pred_fallthru
        _
      // Predicated region
      $region29: #{forward.1} parent=11 // pred_check
        %p262 = pneg %p146
      $region30: #{forward.1} parent=11 // pred_check_branch
        %264 = sbr.rel (%p262) target = $region32
      $region31: #{forward.1} parent=11 // pred_region
        _
      $region32: #{forward.1} parent=11 // pred_fallthru
        _
      // Predicated region
      $region33: #{forward.1} parent=11 // pred_check
        %p265 = pneg %p167
      $region34: #{forward.1} parent=11 // pred_check_branch
        %267 = sbr.rel (%p265) target = $region36
      $region35: #{forward.1} parent=11 // pred_region
        _
      $region36: #{forward.1} parent=11 // pred_fallthru
        _
      // Predicated region
      $region37: #{forward.1} parent=11 // pred_check
        %p268 = pneg %p188
      $region38: #{forward.1} parent=11 // pred_check_branch
        %270 = sbr.rel (%p268) target = $region40
      $region39: #{forward.1} parent=11 // pred_region
        _
      $region40: #{forward.1} parent=11 // pred_fallthru
        _
      // Predicated region
      $region41: #{forward.1} parent=11 // pred_check
        %p271 = pneg %p209
      $region42: #{forward.1} parent=11 // pred_check_branch
        %273 = sbr.rel (%p271) target = $region44
      $region43: #{forward.1} parent=11 // pred_region
        _
      $region44: #{forward.1} parent=11 // pred_fallthru
        _
    $region12: #{forward.1} parent=5 // pred_fallthru
      _
    %p274 = scmp.lt.s32.totalorder %s15, 2
    // Predicated region
    $region45: #{forward.1} parent=5 // pred_check
      %p275 = pneg %p274
    $region46: #{forward.1} parent=5 // pred_check_branch
      %277 = sbr.rel (%p275) target = $region48
    $region47: #{forward.1} parent=5 // pred_region
      // Predicated region
      $region49: #{forward.1} parent=47 // pred_check
        %p278 = pneg %p35
      $region50: #{forward.1} parent=47 // pred_check_branch
        %280 = sbr.rel (%p278) target = $region52
      $region51: #{forward.1} parent=47 // pred_region
        %s281 = smul.u32 16, %s15
        %p282 = scmp.lt.s32.totalorder %s281, 31
        %s283 = scalar_select %p282, %s281, 31
        %s284 = smul.addr %s283, 4
        %s285 = scalar_lea.vmem %s0, %s284
        %s286 = smul.u32 16, %s15
      $region52: #{forward.1} parent=47 // pred_fallthru
        _
    $region48: #{forward.1} parent=5 // pred_fallthru
      _
    %p287 = scmp.le.s32.totalorder 1, %s15
    %p288 = scmp.lt.s32.totalorder %s15, 3
    %p289 = pnand %p287, %p288
    %p290 = pneg %p289
    // Predicated region
    $region53: #{forward.1} parent=5 // pred_check
      _
    $region54: #{forward.1} parent=5 // pred_check_branch
      %292 = sbr.rel (%p289) target = $region56
    $region55: #{forward.1} parent=5 // pred_region
      %s293 = ssub.s32 %s15, 1
      %s294 = smul.u32 16, %s20
      %p295 = scmp.lt.s32.totalorder %s294, 31
      %s296 = scalar_select %p295, %s294, 31
      %s297 = smul.addr %s296, 4
      %s298 = scalar_lea.vmem %s0, %s297
      %p299 = pneg %p41
      %p300 = pneg %p38
      %p301 = pneg %p62
      %p302 = pneg %p59
      %p303 = pneg %p83
      %p304 = pneg %p80
      %p305 = pneg %p104
      %p306 = pneg %p101
      %p307 = pneg %p125
      %p308 = pneg %p122
      %p309 = pneg %p146
      %p310 = pneg %p143
      %p311 = pneg %p167
      %p312 = pneg %p164
      %p313 = pneg %p188
      %p314 = pneg %p185
      %p315 = pneg %p209
      %p316 = pneg %p206
      %p317 = pneg %p235
      %p318 = pneg %p232
      %p319 = scmp.lt.s32.totalorder %s20, 1
      %s320 = scalar_select %p319, %s20, 1
      %s321 = smul.addr %s320, 8
      %s322 = scalar_lea.vmem %s9, %s321
      %s323 = smul.u32 16, %s20
      %p324 = scmp.lt.s32.totalorder %s323, 31
      %s325 = scalar_select %p324, %s323, 31
      %s326 = smul.addr %s325, 4
      %s327 = scalar_lea.vmem %s0, %s326
      %s328 = smul.u32 16, %s20
      %p329 = scmp.lt.s32.totalorder %s20, 1
      %s330 = scalar_select %p329, %s20, 1
      %s331 = smul.addr %s330, 8
      %s332 = scalar_lea.vmem %s9, %s331
      %v334 = vld [vmem:[%s327] sm:$0xf]
      %v335 = vld [vmem:[%s327 + $0x4] sm:$0xf]
      %v336 = vld [vmem:[%s327 + $0x8] sm:$0xf]
      %v337 = vld [vmem:[%s327 + $0xc] sm:$0xf]
      %v338 = vld [vmem:[%s327 + $0x10] sm:$0xf]
      %v339 = vld [vmem:[%s327 + $0x14] sm:$0xf]
      %v340 = vld [vmem:[%s327 + $0x18] sm:$0xf]
      %v341 = vld [vmem:[%s327 + $0x1c] sm:$0xf]
      %v342 = vld [vmem:[%s327 + $0x20] sm:$0xf]
      %v343 = vld [vmem:[%s327 + $0x24] sm:$0xf]
      %v344 = vld [vmem:[%s327 + $0x28] sm:$0xf]
      %v345 = vld [vmem:[%s327 + $0x2c] sm:$0xf]
      %v346 = vld [vmem:[%s327 + $0x30] sm:$0xf]
      %v347 = vld [vmem:[%s327 + $0x34] sm:$0xf]
      %v348 = vld [vmem:[%s327 + $0x38] sm:$0xf]
      %v349 = vld [vmem:[%s327 + $0x3c] sm:$0xf]
      %v350 = vld [vmem:[%s1] sm:$0xff]
      %v351 = vld [vmem:[%s1 + $0x8] sm:$0xff]
      %v352 = vld [vmem:[%s2] sm:$0x3]
      %v354 = vlaneseq
      %v355 = vshrl.u32 %v354, 7
      %v356 = vsub.s32 0, %v355
      %v357 = vrot.slane %v352, %v356
      %v358 = vlaneseq
      %v359 = vshrl.u32 %v358, 7
      %v360 = vsub.s32 1, %v359
      %v361 = vrot.slane %v352, %v360
      %v380 = vunpack.c.l.b16 %v334
      %v381 = vunpack.c.l.b16 %v335
      %v382 = vunpack.c.l.b16 %v336
      %v383 = vunpack.c.l.b16 %v337
      %v384 = vunpack.c.l.b16 %v338
      %v385 = vunpack.c.l.b16 %v339
      %v386 = vunpack.c.l.b16 %v340
      %v387 = vunpack.c.l.b16 %v341
      %v388 = vunpack.c.l.b16 %v342
      %v389 = vunpack.c.l.b16 %v343
      %v390 = vunpack.c.l.b16 %v344
      %v391 = vunpack.c.l.b16 %v345
      %v392 = vunpack.c.l.b16 %v346
      %v393 = vunpack.c.l.b16 %v347
      %v394 = vunpack.c.l.b16 %v348
      %v395 = vunpack.c.l.b16 %v349
      %v396 = vpack.c.b16 %v381, %v380
      %v397 = vpack.c.b16 %v383, %v382
      %v398 = vpack.c.b16 %v385, %v384
      %v399 = vpack.c.b16 %v387, %v386
      %v400 = vpack.c.b16 %v389, %v388
      %v401 = vpack.c.b16 %v391, %v390
      %v402 = vpack.c.b16 %v393, %v392
      %v403 = vpack.c.b16 %v395, %v394
      %v406 = vunpack.c.l.b16 %v350
      %v407 = vunpack.c.h.b16 %v350
      %v408 = vunpack.c.l.b16 %v351
      %v409 = vunpack.c.h.b16 %v351
      %v410 = vpack.c.b16 %v408, %v406
      %v411 = vpack.c.b16 %v409, %v407
      %vm414 = vcmask 130048
      %v416 = vsel %vm414, %v396, 0
      %v419 = vsel %vm414, %v397, 0
      %v422 = vsel %vm414, %v398, 0
      %v425 = vsel %vm414, %v399, 0
      %v428 = vsel %vm414, %v400, 0
      %v431 = vsel %vm414, %v401, 0
      %v434 = vsel %vm414, %v402, 0
      %v437 = vsel %vm414, %v403, 0
      %439 = vmatprep.subr.bf16.mxu0 %v411
      %440 = vmatpush1.bf16.msra.mxu0 %v410
      %441 = vmatprep.subr.bf16.mxu0 0
      %442 = vmatpush1.bf16.msra.mxu0 0
      %443 = vmatprep.subr.bf16.mxu0 0
      %444 = vmatpush1.bf16.msra.mxu0 0
      %445 = vmatprep.subr.bf16.mxu0 0
      %446 = vmatpush1.bf16.msra.mxu0 0
      %447 = vmatprep.subr.bf16.mxu0 0
      %448 = vmatpush1.bf16.msra.mxu0 0
      %449 = vmatprep.subr.bf16.mxu0 0
      %450 = vmatpush1.bf16.msra.mxu0 0
      %451 = vmatprep.subr.bf16.mxu0 0
      %452 = vmatpush1.bf16.msra.mxu0 0
      %453 = vmatprep.subr.bf16.mxu0 0
      %454 = vmatpush1.bf16.msra.mxu0 0
      %455 = vmatprep.subr.bf16.mxu0 0
      %456 = vmatpush1.bf16.msra.mxu0 0
      %457 = vmatprep.subr.bf16.mxu0 0
      %458 = vmatpush1.bf16.msra.mxu0 0
      %459 = vmatprep.subr.bf16.mxu0 0
      %460 = vmatpush1.bf16.msra.mxu0 0
      %461 = vmatprep.subr.bf16.mxu0 0
      %462 = vmatpush1.bf16.msra.mxu0 0
      %463 = vmatprep.subr.bf16.mxu0 0
      %464 = vmatpush1.bf16.msra.mxu0 0
      %465 = vmatprep.subr.bf16.mxu0 0
      %466 = vmatpush1.bf16.msra.mxu0 0
      %467 = vmatprep.subr.bf16.mxu0 0
      %468 = vmatpush1.bf16.msra.mxu0 0
      %469 = vmatprep.subr.bf16.mxu0 0
      %470 = vmatpush1.bf16.msra.mxu0 0
      %471 = vmatprep.mubr.bf16.mxu0 0
      %472 = vmatmul.mubr.bf16.gmra.mrb[0].mxu0 %v416
      %v473 = vpop.f32.mrb[0].mxu0
      %v474 = vadd.f32 %v357, %v473
      %v475 = vpop.f32.mrb[0].mxu0
      %v476 = vadd.f32 %v361, %v475
      %v477 = vpop.f32.mrb[0].mxu0
      %v478 = vadd.f32 %v357, %v477
      %v479 = vpop.f32.mrb[0].mxu0
      %v480 = vadd.f32 %v361, %v479
      %481 = vmatprep.mubr.bf16.mxu0 0
      %482 = vmatmul.mubr.bf16.gmra.mrb[0].mxu0 %v419
      %v483 = vpop.f32.mrb[0].mxu0
      %v484 = vadd.f32 %v357, %v483
      %v485 = vpop.f32.mrb[0].mxu0
      %v486 = vadd.f32 %v361, %v485
      %v487 = vpop.f32.mrb[0].mxu0
      %v488 = vadd.f32 %v357, %v487
      %v489 = vpop.f32.mrb[0].mxu0
      %v490 = vadd.f32 %v361, %v489
      %491 = vmatprep.mubr.bf16.mxu0 0
      %492 = vmatmul.mubr.bf16.gmra.mrb[0].mxu0 %v422
      %v493 = vpop.f32.mrb[0].mxu0
      %v494 = vadd.f32 %v357, %v493
      %v495 = vpop.f32.mrb[0].mxu0
      %v496 = vadd.f32 %v361, %v495
      %v497 = vpop.f32.mrb[0].mxu0
      %v498 = vadd.f32 %v357, %v497
      %v499 = vpop.f32.mrb[0].mxu0
      %v500 = vadd.f32 %v361, %v499
      %501 = vmatprep.mubr.bf16.mxu0 0
      %502 = vmatmul.mubr.bf16.gmra.mrb[0].mxu0 %v425
      %v503 = vpop.f32.mrb[0].mxu0
      %v504 = vadd.f32 %v357, %v503
      %v505 = vpop.f32.mrb[0].mxu0
      %v506 = vadd.f32 %v361, %v505
      %v507 = vpop.f32.mrb[0].mxu0
      %v508 = vadd.f32 %v357, %v507
      %v509 = vpop.f32.mrb[0].mxu0
      %v510 = vadd.f32 %v361, %v509
      %511 = vmatprep.mubr.bf16.mxu0 0
      %512 = vmatmul.mubr.bf16.gmra.mrb[0].mxu0 %v428
      %v513 = vpop.f32.mrb[0].mxu0
      %v514 = vadd.f32 %v357, %v513
      %v515 = vpop.f32.mrb[0].mxu0
      %v516 = vadd.f32 %v361, %v515
      %v517 = vpop.f32.mrb[0].mxu0
      %v518 = vadd.f32 %v357, %v517
      %v519 = vpop.f32.mrb[0].mxu0
      %v520 = vadd.f32 %v361, %v519
      %521 = vmatprep.mubr.bf16.mxu0 0
      %522 = vmatmul.mubr.bf16.gmra.mrb[0].mxu0 %v431
      %v523 = vpop.f32.mrb[0].mxu0
      %v524 = vadd.f32 %v357, %v523
      %v525 = vpop.f32.mrb[0].mxu0
      %v526 = vadd.f32 %v361, %v525
      %v527 = vpop.f32.mrb[0].mxu0
      %v528 = vadd.f32 %v357, %v527
      %v529 = vpop.f32.mrb[0].mxu0
      %v530 = vadd.f32 %v361, %v529
      %531 = vmatprep.mubr.bf16.mxu0 0
      %532 = vmatmul.mubr.bf16.gmra.mrb[0].mxu0 %v434
      %v533 = vpop.f32.mrb[0].mxu0
      %v534 = vadd.f32 %v357, %v533
      %v535 = vpop.f32.mrb[0].mxu0
      %v536 = vadd.f32 %v361, %v535
      %v537 = vpop.f32.mrb[0].mxu0
      %v538 = vadd.f32 %v357, %v537
      %v539 = vpop.f32.mrb[0].mxu0
      %v540 = vadd.f32 %v361, %v539
      %541 = vmatprep.mubr.bf16.mxu0 0
      %542 = vmatmul.mubr.bf16.gmra.mrb[0].mxu0 %v437
      %v543 = vpop.f32.mrb[0].mxu0
      %v544 = vadd.f32 %v357, %v543
      %v545 = vpop.f32.mrb[0].mxu0
      %v546 = vadd.f32 %v361, %v545
      %v547 = vpop.f32.mrb[0].mxu0
      %v548 = vadd.f32 %v357, %v547
      %v549 = vpop.f32.mrb[0].mxu0
      %v550 = vadd.f32 %v361, %v549
      %551 = vdwg.mxu0
      %v552 = vmax.f32 %v474, %v476
      %v553 = vmax.f32 %v478, %v480
      %v554 = vmax.f32 %v484, %v486
      %v555 = vmax.f32 %v488, %v490
      %v556 = vmax.f32 %v494, %v496
      %v557 = vmax.f32 %v498, %v500
      %v558 = vmax.f32 %v504, %v506
      %v559 = vmax.f32 %v508, %v510
      %v560 = vmax.f32 %v514, %v516
      %v561 = vmax.f32 %v518, %v520
      %v562 = vmax.f32 %v524, %v526
      %v563 = vmax.f32 %v528, %v530
      %v564 = vmax.f32 %v534, %v536
      %v565 = vmax.f32 %v538, %v540
      %v566 = vmax.f32 %v544, %v546
      %v567 = vmax.f32 %v548, %v550
      %v568 = vpack.c.bf16 %v553, %v552
      %v569 = vpack.c.bf16 %v555, %v554
      %v570 = vpack.c.bf16 %v557, %v556
      %v571 = vpack.c.bf16 %v559, %v558
      %v572 = vpack.c.bf16 %v561, %v560
      %v573 = vpack.c.bf16 %v563, %v562
      %v574 = vpack.c.bf16 %v565, %v564
      %v575 = vpack.c.bf16 %v567, %v566
      %v576 = vld [vmem:[%s3] sm:$0xf]
      %v577 = vld [vmem:[%s3 + $0x4] sm:$0xf]
      %v578 = vld [vmem:[%s3 + $0x8] sm:$0xf]
      %v579 = vld [vmem:[%s3 + $0xc] sm:$0xf]
      %v580 = vld [vmem:[%s3 + $0x10] sm:$0xf]
      %v581 = vld [vmem:[%s3 + $0x14] sm:$0xf]
      %v582 = vld [vmem:[%s3 + $0x18] sm:$0xf]
      %v583 = vld [vmem:[%s3 + $0x1c] sm:$0xf]
      %v584 = vld [vmem:[%s3 + $0x20] sm:$0xf]
      %v585 = vld [vmem:[%s3 + $0x24] sm:$0xf]
      %v586 = vld [vmem:[%s3 + $0x28] sm:$0xf]
      %v587 = vld [vmem:[%s3 + $0x2c] sm:$0xf]
      %v588 = vld [vmem:[%s3 + $0x30] sm:$0xf]
      %v589 = vld [vmem:[%s3 + $0x34] sm:$0xf]
      %v590 = vld [vmem:[%s3 + $0x38] sm:$0xf]
      %v591 = vld [vmem:[%s3 + $0x3c] sm:$0xf]
      %v592 = vld [vmem:[%s4] sm:$0x1]
      %v594 = vlaneseq
      %v595 = vshrl.u32 %v594, 7
      %v596 = vsub.s32 0, %v595
      %v597 = vrot.slane %v592, %v596
      %v615 = vunpack.c.l.b16 %v576
      %v616 = vunpack.c.l.b16 %v577
      %v617 = vunpack.c.l.b16 %v578
      %v618 = vunpack.c.l.b16 %v579
      %v619 = vunpack.c.l.b16 %v580
      %v620 = vunpack.c.l.b16 %v581
      %v621 = vunpack.c.l.b16 %v582
      %v622 = vunpack.c.l.b16 %v583
      %v623 = vunpack.c.l.b16 %v584
      %v624 = vunpack.c.l.b16 %v585
      %v625 = vunpack.c.l.b16 %v586
      %v626 = vunpack.c.l.b16 %v587
      %v627 = vunpack.c.l.b16 %v588
      %v628 = vunpack.c.l.b16 %v589
      %v629 = vunpack.c.l.b16 %v590
      %v630 = vunpack.c.l.b16 %v591
      %v631 = vpack.c.b16 %v616, %v615
      %v632 = vpack.c.b16 %v618, %v617
      %v633 = vpack.c.b16 %v620, %v619
      %v634 = vpack.c.b16 %v622, %v621
      %v635 = vpack.c.b16 %v624, %v623
      %v636 = vpack.c.b16 %v626, %v625
      %v637 = vpack.c.b16 %v628, %v627
      %v638 = vpack.c.b16 %v630, %v629
      %647 = vmatprep.subr.bf16.mxu0 0
      %648 = vmatpush1.bf16.msra.mxu0 %v631
      %649 = vmatprep.subr.bf16.mxu0 0
      %650 = vmatpush1.bf16.msra.mxu0 %v632
      %651 = vmatprep.subr.bf16.mxu0 0
      %652 = vmatpush1.bf16.msra.mxu0 %v633
      %653 = vmatprep.subr.bf16.mxu0 0
      %654 = vmatpush1.bf16.msra.mxu0 %v634
      %655 = vmatprep.subr.bf16.mxu0 0
      %656 = vmatpush1.bf16.msra.mxu0 %v635
      %657 = vmatprep.subr.bf16.mxu0 0
      %658 = vmatpush1.bf16.msra.mxu0 %v636
      %659 = vmatprep.subr.bf16.mxu0 0
      %660 = vmatpush1.bf16.msra.mxu0 %v637
      %661 = vmatprep.subr.bf16.mxu0 0
      %662 = vmatpush1.bf16.msra.mxu0 %v638
      %663 = vmatprep.subr.bf16.mxu0 0
      %664 = vmatpush1.bf16.msra.mxu0 0
      %665 = vmatprep.subr.bf16.mxu0 0
      %666 = vmatpush1.bf16.msra.mxu0 0
      %667 = vmatprep.subr.bf16.mxu0 0
      %668 = vmatpush1.bf16.msra.mxu0 0
      %669 = vmatprep.subr.bf16.mxu0 0
      %670 = vmatpush1.bf16.msra.mxu0 0
      %671 = vmatprep.subr.bf16.mxu0 0
      %672 = vmatpush1.bf16.msra.mxu0 0
      %673 = vmatprep.subr.bf16.mxu0 0
      %674 = vmatpush1.bf16.msra.mxu0 0
      %675 = vmatprep.subr.bf16.mxu0 0
      %676 = vmatpush1.bf16.msra.mxu0 0
      %677 = vmatprep.subr.bf16.mxu0 0
      %678 = vmatpush1.bf16.msra.mxu0 0
      %679 = vmatprep.mubr.bf16.mxu0 0
      %680 = vmatmul.mubr.bf16.gmra.mrb[0].mxu0 %v568
      %v681 = vpop.f32.mrb[0].mxu0
      %v682 = vadd.f32 %v597, %v681
      %v683 = vpop.f32.mrb[0].mxu0
      %v684 = vpop.f32.mrb[0].mxu0
      %v685 = vadd.f32 %v597, %v684
      %v686 = vpop.f32.mrb[0].mxu0
      %687 = vmatprep.mubr.bf16.mxu0 0
      %688 = vmatmul.mubr.bf16.gmra.mrb[0].mxu0 %v569
      %v689 = vpop.f32.mrb[0].mxu0
      %v690 = vadd.f32 %v597, %v689
      %v691 = vpop.f32.mrb[0].mxu0
      %v692 = vpop.f32.mrb[0].mxu0
      %v693 = vadd.f32 %v597, %v692
      %v694 = vpop.f32.mrb[0].mxu0
      %695 = vmatprep.mubr.bf16.mxu0 0
      %696 = vmatmul.mubr.bf16.gmra.mrb[0].mxu0 %v570
      %v697 = vpop.f32.mrb[0].mxu0
      %v698 = vadd.f32 %v597, %v697
      %v699 = vpop.f32.mrb[0].mxu0
      %v700 = vpop.f32.mrb[0].mxu0
      %v701 = vadd.f32 %v597, %v700
      %v702 = vpop.f32.mrb[0].mxu0
      %703 = vmatprep.mubr.bf16.mxu0 0
      %704 = vmatmul.mubr.bf16.gmra.mrb[0].mxu0 %v571
      %v705 = vpop.f32.mrb[0].mxu0
      %v706 = vadd.f32 %v597, %v705
      %v707 = vpop.f32.mrb[0].mxu0
      %v708 = vpop.f32.mrb[0].mxu0
      %v709 = vadd.f32 %v597, %v708
      %v710 = vpop.f32.mrb[0].mxu0
      %711 = vmatprep.mubr.bf16.mxu0 0
      %712 = vmatmul.mubr.bf16.gmra.mrb[0].mxu0 %v572
      %v713 = vpop.f32.mrb[0].mxu0
      %v714 = vadd.f32 %v597, %v713
      %v715 = vpop.f32.mrb[0].mxu0
      %v716 = vpop.f32.mrb[0].mxu0
      %v717 = vadd.f32 %v597, %v716
      %v718 = vpop.f32.mrb[0].mxu0
      %719 = vmatprep.mubr.bf16.mxu0 0
      %720 = vmatmul.mubr.bf16.gmra.mrb[0].mxu0 %v573
      %v721 = vpop.f32.mrb[0].mxu0
      %v722 = vadd.f32 %v597, %v721
      %v723 = vpop.f32.mrb[0].mxu0
      %v724 = vpop.f32.mrb[0].mxu0
      %v725 = vadd.f32 %v597, %v724
      %v726 = vpop.f32.mrb[0].mxu0
      %727 = vmatprep.mubr.bf16.mxu0 0
      %728 = vmatmul.mubr.bf16.gmra.mrb[0].mxu0 %v574
      %v729 = vpop.f32.mrb[0].mxu0
      %v730 = vadd.f32 %v597, %v729
      %v731 = vpop.f32.mrb[0].mxu0
      %v732 = vpop.f32.mrb[0].mxu0
      %v733 = vadd.f32 %v597, %v732
      %v734 = vpop.f32.mrb[0].mxu0
      %735 = vmatprep.mubr.bf16.mxu0 0
      %736 = vmatmul.mubr.bf16.gmra.mrb[0].mxu0 %v575
      %v737 = vpop.f32.mrb[0].mxu0
      %v738 = vadd.f32 %v597, %v737
      %v739 = vpop.f32.mrb[0].mxu0
      %v740 = vpop.f32.mrb[0].mxu0
      %v741 = vadd.f32 %v597, %v740
      %v742 = vpop.f32.mrb[0].mxu0
      %743 = vdwg.mxu0
      %v744 = vmax.f32 %v682, 0.0
      %v745 = vmax.f32 %v685, 0.0
      %v746 = vmax.f32 %v690, 0.0
      %v747 = vmax.f32 %v693, 0.0
      %v748 = vmax.f32 %v698, 0.0
      %v749 = vmax.f32 %v701, 0.0
      %v750 = vmax.f32 %v706, 0.0
      %v751 = vmax.f32 %v709, 0.0
      %v752 = vmax.f32 %v714, 0.0
      %v753 = vmax.f32 %v717, 0.0
      %v754 = vmax.f32 %v722, 0.0
      %v755 = vmax.f32 %v725, 0.0
      %v756 = vmax.f32 %v730, 0.0
      %v757 = vmax.f32 %v733, 0.0
      %v758 = vmax.f32 %v738, 0.0
      %v759 = vmax.f32 %v741, 0.0
      %v760 = vpack.c.bf16 %v745, %v744
      %v761 = vpack.c.bf16 %v747, %v746
      %v762 = vpack.c.bf16 %v749, %v748
      %v763 = vpack.c.bf16 %v751, %v750
      %v764 = vpack.c.bf16 %v753, %v752
      %v765 = vpack.c.bf16 %v755, %v754
      %v766 = vpack.c.bf16 %v757, %v756
      %v767 = vpack.c.bf16 %v759, %v758
      %v768 = vld [vmem:[%s5] sm:$0xf]
      %v769 = vld [vmem:[%s5 + $0x4] sm:$0xf]
      %v770 = vld [vmem:[%s5 + $0x8] sm:$0xf]
      %v771 = vld [vmem:[%s5 + $0xc] sm:$0xf]
      %v772 = vld [vmem:[%s5 + $0x10] sm:$0xf]
      %v773 = vld [vmem:[%s5 + $0x14] sm:$0xf]
      %v774 = vld [vmem:[%s5 + $0x18] sm:$0xf]
      %v775 = vld [vmem:[%s5 + $0x1c] sm:$0xf]
      %v776 = vld [vmem:[%s5 + $0x20] sm:$0xf]
      %v777 = vld [vmem:[%s5 + $0x24] sm:$0xf]
      %v778 = vld [vmem:[%s5 + $0x28] sm:$0xf]
      %v779 = vld [vmem:[%s5 + $0x2c] sm:$0xf]
      %v780 = vld [vmem:[%s5 + $0x30] sm:$0xf]
      %v781 = vld [vmem:[%s5 + $0x34] sm:$0xf]
      %v782 = vld [vmem:[%s5 + $0x38] sm:$0xf]
      %v783 = vld [vmem:[%s5 + $0x3c] sm:$0xf]
      %v784 = vld [vmem:[%s6] sm:$0x1]
      %v786 = vlaneseq
      %v787 = vshrl.u32 %v786, 7
      %v788 = vsub.s32 0, %v787
      %v789 = vrot.slane %v784, %v788
      %v807 = vunpack.c.l.b16 %v768
      %v808 = vunpack.c.l.b16 %v769
      %v809 = vunpack.c.l.b16 %v770
      %v810 = vunpack.c.l.b16 %v771
      %v811 = vunpack.c.l.b16 %v772
      %v812 = vunpack.c.l.b16 %v773
      %v813 = vunpack.c.l.b16 %v774
      %v814 = vunpack.c.l.b16 %v775
      %v815 = vunpack.c.l.b16 %v776
      %v816 = vunpack.c.l.b16 %v777
      %v817 = vunpack.c.l.b16 %v778
      %v818 = vunpack.c.l.b16 %v779
      %v819 = vunpack.c.l.b16 %v780
      %v820 = vunpack.c.l.b16 %v781
      %v821 = vunpack.c.l.b16 %v782
      %v822 = vunpack.c.l.b16 %v783
      %v823 = vpack.c.b16 %v808, %v807
      %v824 = vpack.c.b16 %v810, %v809
      %v825 = vpack.c.b16 %v812, %v811
      %v826 = vpack.c.b16 %v814, %v813
      %v827 = vpack.c.b16 %v816, %v815
      %v828 = vpack.c.b16 %v818, %v817
      %v829 = vpack.c.b16 %v820, %v819
      %v830 = vpack.c.b16 %v822, %v821
      %839 = vmatprep.subr.bf16.mxu0 0
      %840 = vmatpush1.bf16.msra.mxu0 %v823
      %841 = vmatprep.subr.bf16.mxu0 0
      %842 = vmatpush1.bf16.msra.mxu0 %v824
      %843 = vmatprep.subr.bf16.mxu0 0
      %844 = vmatpush1.bf16.msra.mxu0 %v825
      %845 = vmatprep.subr.bf16.mxu0 0
      %846 = vmatpush1.bf16.msra.mxu0 %v826
      %847 = vmatprep.subr.bf16.mxu0 0
      %848 = vmatpush1.bf16.msra.mxu0 %v827
      %849 = vmatprep.subr.bf16.mxu0 0
      %850 = vmatpush1.bf16.msra.mxu0 %v828
      %851 = vmatprep.subr.bf16.mxu0 0
      %852 = vmatpush1.bf16.msra.mxu0 %v829
      %853 = vmatprep.subr.bf16.mxu0 0
      %854 = vmatpush1.bf16.msra.mxu0 %v830
      %855 = vmatprep.subr.bf16.mxu0 0
      %856 = vmatpush1.bf16.msra.mxu0 0
      %857 = vmatprep.subr.bf16.mxu0 0
      %858 = vmatpush1.bf16.msra.mxu0 0
      %859 = vmatprep.subr.bf16.mxu0 0
      %860 = vmatpush1.bf16.msra.mxu0 0
      %861 = vmatprep.subr.bf16.mxu0 0
      %862 = vmatpush1.bf16.msra.mxu0 0
      %863 = vmatprep.subr.bf16.mxu0 0
      %864 = vmatpush1.bf16.msra.mxu0 0
      %865 = vmatprep.subr.bf16.mxu0 0
      %866 = vmatpush1.bf16.msra.mxu0 0
      %867 = vmatprep.subr.bf16.mxu0 0
      %868 = vmatpush1.bf16.msra.mxu0 0
      %869 = vmatprep.subr.bf16.mxu0 0
      %870 = vmatpush1.bf16.msra.mxu0 0
      %871 = vmatprep.mubr.bf16.mxu0 0
      %872 = vmatmul.mubr.bf16.gmra.mrb[0].mxu0 %v760
      %v873 = vpop.f32.mrb[0].mxu0
      %v874 = vadd.f32 %v789, %v873
      %v875 = vpop.f32.mrb[0].mxu0
      %v876 = vpop.f32.mrb[0].mxu0
      %v877 = vadd.f32 %v789, %v876
      %v878 = vpop.f32.mrb[0].mxu0
      %879 = vmatprep.mubr.bf16.mxu0 0
      %880 = vmatmul.mubr.bf16.gmra.mrb[0].mxu0 %v761
      %v881 = vpop.f32.mrb[0].mxu0
      %v882 = vadd.f32 %v789, %v881
      %v883 = vpop.f32.mrb[0].mxu0
      %v884 = vpop.f32.mrb[0].mxu0
      %v885 = vadd.f32 %v789, %v884
      %v886 = vpop.f32.mrb[0].mxu0
      %887 = vmatprep.mubr.bf16.mxu0 0
      %888 = vmatmul.mubr.bf16.gmra.mrb[0].mxu0 %v762
      %v889 = vpop.f32.mrb[0].mxu0
      %v890 = vadd.f32 %v789, %v889
      %v891 = vpop.f32.mrb[0].mxu0
      %v892 = vpop.f32.mrb[0].mxu0
      %v893 = vadd.f32 %v789, %v892
      %v894 = vpop.f32.mrb[0].mxu0
      %895 = vmatprep.mubr.bf16.mxu0 0
      %896 = vmatmul.mubr.bf16.gmra.mrb[0].mxu0 %v763
      %v897 = vpop.f32.mrb[0].mxu0
      %v898 = vadd.f32 %v789, %v897
      %v899 = vpop.f32.mrb[0].mxu0
      %v900 = vpop.f32.mrb[0].mxu0
      %v901 = vadd.f32 %v789, %v900
      %v902 = vpop.f32.mrb[0].mxu0
      %903 = vmatprep.mubr.bf16.mxu0 0
      %904 = vmatmul.mubr.bf16.gmra.mrb[0].mxu0 %v764
      %v905 = vpop.f32.mrb[0].mxu0
      %v906 = vadd.f32 %v789, %v905
      %v907 = vpop.f32.mrb[0].mxu0
      %v908 = vpop.f32.mrb[0].mxu0
      %v909 = vadd.f32 %v789, %v908
      %v910 = vpop.f32.mrb[0].mxu0
      %911 = vmatprep.mubr.bf16.mxu0 0
      %912 = vmatmul.mubr.bf16.gmra.mrb[0].mxu0 %v765
      %v913 = vpop.f32.mrb[0].mxu0
      %v914 = vadd.f32 %v789, %v913
      %v915 = vpop.f32.mrb[0].mxu0
      %v916 = vpop.f32.mrb[0].mxu0
      %v917 = vadd.f32 %v789, %v916
      %v918 = vpop.f32.mrb[0].mxu0
      %919 = vmatprep.mubr.bf16.mxu0 0
      %920 = vmatmul.mubr.bf16.gmra.mrb[0].mxu0 %v766
      %v921 = vpop.f32.mrb[0].mxu0
      %v922 = vadd.f32 %v789, %v921
      %v923 = vpop.f32.mrb[0].mxu0
      %v924 = vpop.f32.mrb[0].mxu0
      %v925 = vadd.f32 %v789, %v924
      %v926 = vpop.f32.mrb[0].mxu0
      %927 = vmatprep.mubr.bf16.mxu0 0
      %928 = vmatmul.mubr.bf16.gmra.mrb[0].mxu0 %v767
      %v929 = vpop.f32.mrb[0].mxu0
      %v930 = vadd.f32 %v789, %v929
      %v931 = vpop.f32.mrb[0].mxu0
      %v932 = vpop.f32.mrb[0].mxu0
      %v933 = vadd.f32 %v789, %v932
      %v934 = vpop.f32.mrb[0].mxu0
      %935 = vdwg.mxu0
      %v936 = vmax.f32 %v874, 0.0
      %v937 = vmax.f32 %v877, 0.0
      %v938 = vmax.f32 %v882, 0.0
      %v939 = vmax.f32 %v885, 0.0
      %v940 = vmax.f32 %v890, 0.0
      %v941 = vmax.f32 %v893, 0.0
      %v942 = vmax.f32 %v898, 0.0
      %v943 = vmax.f32 %v901, 0.0
      %v944 = vmax.f32 %v906, 0.0
      %v945 = vmax.f32 %v909, 0.0
      %v946 = vmax.f32 %v914, 0.0
      %v947 = vmax.f32 %v917, 0.0
      %v948 = vmax.f32 %v922, 0.0
      %v949 = vmax.f32 %v925, 0.0
      %v950 = vmax.f32 %v930, 0.0
      %v951 = vmax.f32 %v933, 0.0
      %v952 = vld [vmem:[%s7] sm:$0xf]
      %v953 = vpack.c.bf16 %v937, %v936
      %v954 = vpack.c.bf16 %v939, %v938
      %v955 = vpack.c.bf16 %v941, %v940
      %v956 = vpack.c.bf16 %v943, %v942
      %v957 = vpack.c.bf16 %v945, %v944
      %v958 = vpack.c.bf16 %v947, %v946
      %v959 = vpack.c.bf16 %v949, %v948
      %v960 = vpack.c.bf16 %v951, %v950
      %v961 = vld [vmem:[%s8] sm:$0xff]
      %963 = vset.pattern.permute.xlu0 0
      %964 = vperm.xlu0 %963, %v961
      %v965 = vpop.permute.xlu0 %964
      %967 = vmatprep.subr.bf16.mxu0 0
      %968 = vmatpush1.bf16.xpose.msra.mxu0 %v953
      %969 = vmatprep.subr.bf16.mxu0 0
      %970 = vmatpush1.bf16.xpose.msra.mxu0 %v954
      %971 = vmatprep.subr.bf16.mxu0 0
      %972 = vmatpush1.bf16.xpose.msra.mxu0 %v955
      %973 = vmatprep.subr.bf16.mxu0 0
      %974 = vmatpush1.bf16.xpose.msra.mxu0 %v956
      %975 = vmatprep.subr.bf16.mxu0 0
      %976 = vmatpush1.bf16.xpose.msra.mxu0 %v957
      %977 = vmatprep.subr.bf16.mxu0 0
      %978 = vmatpush1.bf16.xpose.msra.mxu0 %v958
      %979 = vmatprep.subr.bf16.mxu0 0
      %980 = vmatpush1.bf16.xpose.msra.mxu0 %v959
      %981 = vmatprep.subr.bf16.mxu0 0
      %982 = vmatpush1.bf16.xpose.msra.mxu0 %v960
      %983 = vmatprep.subr.bf16.mxu0 0
      %984 = vmatpush1.bf16.xpose.msra.mxu0 0
      %985 = vmatprep.subr.bf16.mxu0 0
      %986 = vmatpush1.bf16.xpose.msra.mxu0 0
      %987 = vmatprep.subr.bf16.mxu0 0
      %988 = vmatpush1.bf16.xpose.msra.mxu0 0
      %989 = vmatprep.subr.bf16.mxu0 0
      %990 = vmatpush1.bf16.xpose.msra.mxu0 0
      %991 = vmatprep.subr.bf16.mxu0 0
      %992 = vmatpush1.bf16.xpose.msra.mxu0 0
      %993 = vmatprep.subr.bf16.mxu0 0
      %994 = vmatpush1.bf16.xpose.msra.mxu0 0
      %995 = vmatprep.subr.bf16.mxu0 0
      %996 = vmatpush1.bf16.xpose.msra.mxu0 0
      %997 = vmatprep.subr.bf16.mxu0 0
      %998 = vmatpush1.bf16.xpose.msra.mxu0 0
      %999 = vmatprep.mubr.bf16.mxu0 0
      %1000 = vmatmul.mubr.bf16.gmra.mrb[0].mxu0 %v952
      %v1001 = vpop.f32.mrb[0].mxu0
      %v1002 = vadd.f32 %v965, %v1001
      %v1003 = vpop.f32.mrb[0].mxu0
      %v1004 = vpop.f32.mrb[0].mxu0
      %v1005 = vpop.f32.mrb[0].mxu0
      %1006 = vdwg.mxu0
      %1007 = vst [vmem:[%s332] sm:$0xff] %v1002
      %p1008 = scmp.lt.s32.totalorder %s20, 1
      %s1009 = scalar_select %p1008, %s20, 1
      %s1010 = smul.addr %s1009, 8
      %s1011 = scalar_lea.vmem %s9, %s1010
      // Predicated region
      $region57: #{forward.1} parent=55 // pred_check
        %p1012 = pneg %p232
      $region58: #{forward.1} parent=55 // pred_check_branch
        %1014 = sbr.rel (%p1012) target = $region60
      $region59: #{forward.1} parent=55 // pred_region
        _
      $region60: #{forward.1} parent=55 // pred_fallthru
        _
    $region56: #{forward.1} parent=5 // pred_fallthru
      _
    %p1015 = scmp.le.s32.totalorder 2, %s15
    // Predicated region
    $region61: #{forward.1} parent=5 // pred_check
      %p1016 = pneg %p1015
    $region62: #{forward.1} parent=5 // pred_check_branch
      %1018 = sbr.rel (%p1016) target = $region64
    $region63: #{forward.1} parent=5 // pred_region
      %s1019 = ssub.s32 %s15, 2
      // Predicated region
      $region65: #{forward.1} parent=63 // pred_check
        %p1020 = pneg %p238
      $region66: #{forward.1} parent=63 // pred_check_branch
        %1022 = sbr.rel (%p1020) target = $region68
      $region67: #{forward.1} parent=63 // pred_region
        %p1023 = scmp.lt.s32.totalorder %s21, 1
        %s1024 = scalar_select %p1023, %s21, 1
        %s1025 = smul.addr %s1024, 8
        %s1026 = scalar_lea.vmem %s9, %s1025
      $region68: #{forward.1} parent=63 // pred_fallthru
        _
    $region64: #{forward.1} parent=5 // pred_fallthru
      _
  $region6: #{forward.1} parent=0 // loop_footer
    %s19 = sadd.s32 1, %s15
  $region7: #{forward.1} parent=0 // loop_footer_branch
    %14 = sbr.rel target = $region3
  $region8: #{forward.1} parent=0 // loop_exit
    _

</llo_original>
